<compile_context>
chip_gen: v7x
topology: tpu7x:2x2x1
jax: 0.10.0
libtpu: 0.0.40
codegen_flags: <defaults>
</compile_context>

<pallas_src>
import jax
import jax.numpy as jnp
from jax.experimental import pallas as pl
from jax.experimental.pallas import tpu as pltpu

LOG_SIG_MAX = 2.0
LOG_SIG_MIN = -20.0

DIM_STATE = 100          # layer-1 contraction dim (kept at 100; Mosaic masks)
DIM_HIDDEN = 256
DIM_OUT = 1              # mean and log_std each produce 1 value
DIM_HEAD = 2 * DIM_OUT   # fused [mean | log_std]
HEAD_PAD = 128           # head padded to a full lane tile -> unmasked stores


def _cdiv(a, b):
    return (a + b - 1) // b


def _round_up(x, m):
    return _cdiv(x, m) * m


def _choose_tile_b(batch):
    if batch <= 256:
        # Single tile; a multiple of 16 keeps every layout (f32/bf16) happy.
        return _round_up(batch, 16)
    # At least 2 grid steps so dimension_semantics=("parallel",) can shard the
    # batch across both TensorCores on v7x; cap tiles at 2048 rows (a few MiB
    # of VMEM, far under the 32 MiB scoped budget) to amortize the
    # ~0.35 us/step grid overhead on the single-TC v5e/v6e.
    num_tiles = max(2, _cdiv(batch, 2048))
    return _round_up(_cdiv(batch, num_tiles), 16)


def _gaussian_policy_kernel(x_ref,
                            w1_ref, b1_ref,
                            w2_ref, b2_ref,
                            wh_ref, bh_ref,
                            out_ref):
    # Cast the f32 state tile to bf16 in VMEM (no wrapper pad/cast pass).
    x = x_ref[...].astype(jnp.bfloat16)                        # [tile_b, 100]

    # Layer 1: [tile_b, 100] @ [100, 256] + bias, ReLU (bf16 in, f32 acc).
    h1 = jnp.dot(x, w1_ref[...],
                 preferred_element_type=jnp.float32) + b1_ref[...]
    h1 = jnp.maximum(h1, 0.0).astype(jnp.bfloat16)

    # Layer 2: [tile_b, 256] @ [256, 256] + bias, ReLU.
    h2 = jnp.dot(h1, w2_ref[...],
                 preferred_element_type=jnp.float32) + b2_ref[...]
    h2 = jnp.maximum(h2, 0.0).astype(jnp.bfloat16)

    # Fused head padded to 128 lanes: cols [0, DIM_OUT) = mean,
    # [DIM_OUT, 2*DIM_OUT) = log_std, remaining lanes are zeros (sliced off
    # in the wrapper).  Lane-dense (tile_b, 128) store -> no masked vst.
    head = jnp.dot(h2, wh_ref[...],
                   preferred_element_type=jnp.float32) + bh_ref[...]

    # Clamp every non-mean column (col >= DIM_OUT); mean columns untouched.
    col = jax.lax.broadcasted_iota(jnp.int32, head.shape, 1)
    clipped = jnp.clip(head, LOG_SIG_MIN, LOG_SIG_MAX)
    out_ref[...] = jnp.where(col < DIM_OUT, head, clipped).astype(out_ref.dtype)


def prepare_params(params):
    """One-time weight prep (hoisted out of the forward): bf16 casts and the
    fused, lane-padded head. Call once at init, not per forward step."""
    w1, b1, w2, b2, wm, bm, ws, bs = params
    w1_b = w1.astype(jnp.bfloat16)                                   # [100, 256]
    w2_b = w2.astype(jnp.bfloat16)                                   # [256, 256]
    w_head = jnp.concatenate([wm, ws], axis=1)                       # [256, 2]
    w_head = jnp.pad(w_head, ((0, 0), (0, HEAD_PAD - DIM_HEAD)))
    w_head = w_head.astype(jnp.bfloat16)                             # [256, 128]
    b_head = jnp.concatenate([bm, bs], axis=1)                       # [1, 2]
    b_head = jnp.pad(b_head, ((0, 0), (0, HEAD_PAD - DIM_HEAD)))     # [1, 128]
    return (w1_b, b1, w2_b, b2, w_head, b_head)


@jax.jit
def gaussian_policy_forward(state, prepared):
    """state: [B, DIM_STATE] f32.  Returns (mean, log_std), each [B, 1] f32."""
    w1_b, b1, w2_b, b2, w_head, b_head = prepared
    B = state.shape[0]

    tile_b = _choose_tile_b(B)
    B_pad = _round_up(B, tile_b)
    grid = (B_pad // tile_b,)

    # Only the batch tail is padded (no feature pad, no wrapper dtype cast);
    # for B a multiple of tile_b this is a no-op.
    x = state if B_pad == B else jnp.pad(state, ((0, B_pad - B), (0, 0)))

    cost = pl.CostEstimate(
        flops=2 * B_pad * (DIM_STATE * DIM_HIDDEN
                           + DIM_HIDDEN * DIM_HIDDEN
                           + DIM_HIDDEN * HEAD_PAD),
        transcendentals=0,
        bytes_accessed=(w1_b.size + w2_b.size + w_head.size) * 2
                       + (b1.size + b2.size + b_head.size) * 4
                       + B_pad * (DIM_STATE * 4 + HEAD_PAD * 4),
    )

    fused = pl.pallas_call(
        _gaussian_policy_kernel,
        out_shape=jax.ShapeDtypeStruct((B_pad, HEAD_PAD), jnp.float32),
        grid=grid,
        in_specs=[
            # batch-tiled f32 input, pipelined across the grid (K stays 100).
            pl.BlockSpec((tile_b, DIM_STATE), lambda i: (i, 0)),
            # weights / biases: constant index_map -> DMA'd once, resident.
            pl.BlockSpec((DIM_STATE, DIM_HIDDEN), lambda i: (0, 0)),
            pl.BlockSpec((1, DIM_HIDDEN), lambda i: (0, 0)),
            pl.BlockSpec((DIM_HIDDEN, DIM_HIDDEN), lambda i: (0, 0)),
            pl.BlockSpec((1, DIM_HIDDEN), lambda i: (0, 0)),
            pl.BlockSpec((DIM_HIDDEN, HEAD_PAD), lambda i: (0, 0)),
            pl.BlockSpec((1, HEAD_PAD), lambda i: (0, 0)),
        ],
        out_specs=pl.BlockSpec((tile_b, HEAD_PAD), lambda i: (i, 0)),
        compiler_params=pltpu.CompilerParams(
            dimension_semantics=("parallel",),   # megacore-shard the batch
            vmem_limit_bytes=32 * 1024 * 1024,   # explicit (v5e default is 16 MiB)
        ),
        cost_estimate=cost,
    )(x, w1_b, b1, w2_b, b2, w_head, b_head)

    mean = fused[:B, 0:DIM_OUT]
    log_std = fused[:B, DIM_OUT:DIM_HEAD]
    return mean, log_std


def xavier_uniform(key, fan_in, fan_out, dtype=jnp.float32):
    # matches torch.nn.init.xavier_uniform_ with gain=1 (symmetric in fan_in/out)
    limit = (6.0 / (fan_in + fan_out)) ** 0.5
    # stored as [in, out] (pre-transposed so the kernel computes y = x @ W)
    return jax.random.uniform(key, (fan_in, fan_out), dtype=dtype,
                              minval=-limit, maxval=limit)


def init_params(key):
    k1, k2, k3, k4 = jax.random.split(key, 4)
    w1 = xavier_uniform(k1, DIM_STATE, DIM_HIDDEN)
    b1 = jnp.zeros((1, DIM_HIDDEN), jnp.float32)
    w2 = xavier_uniform(k2, DIM_HIDDEN, DIM_HIDDEN)
    b2 = jnp.zeros((1, DIM_HIDDEN), jnp.float32)
    wm = xavier_uniform(k3, DIM_HIDDEN, DIM_OUT)
    bm = jnp.zeros((1, DIM_OUT), jnp.float32)
    ws = xavier_uniform(k4, DIM_HIDDEN, DIM_OUT)
    bs = jnp.zeros((1, DIM_OUT), jnp.float32)
    return (w1, b1, w2, b2, wm, bm, ws, bs)


def reference_forward(state, params):
    """Pure-JAX reference mirroring the kernel's bf16-operand / f32-acc math."""
    w1, b1, w2, b2, wm, bm, ws, bs = params
    q = lambda a: a.astype(jnp.bfloat16).astype(jnp.float32)
    h1 = jnp.maximum(q(state) @ q(w1) + b1, 0.0)
    h2 = jnp.maximum(q(h1) @ q(w2) + b2, 0.0)
    mean = q(h2) @ q(wm) + bm
    log_std = jnp.clip(q(h2) @ q(ws) + bs, LOG_SIG_MIN, LOG_SIG_MAX)
    return mean, log_std


if __name__ == "__main__":
    key = jax.random.PRNGKey(0)
    k_state, k_params = jax.random.split(key)

    B = 8  # small batch; state.squeeze() is a no-op for batched B > 1
    state = jax.random.normal(k_state, (B, DIM_STATE), dtype=jnp.float32)
    params = init_params(k_params)
    prepared = prepare_params(params)   # one-time weight prep (hoisted out of forward)

    mean, log_std = gaussian_policy_forward(state, prepared)
    jax.block_until_ready((mean, log_std))

    ref_mean, ref_log_std = reference_forward(state, params)
    assert mean.shape == (B, DIM_OUT) and log_std.shape == (B, DIM_OUT)
    # bf16 operands -> loosened tolerance vs the f32 PyTorch math
    assert jnp.allclose(mean, ref_mean, atol=1e-2, rtol=1e-2)
    assert jnp.allclose(log_std, ref_log_std, atol=1e-2, rtol=1e-2)
    assert bool(jnp.all(log_std >= LOG_SIG_MIN)) and bool(jnp.all(log_std <= LOG_SIG_MAX))

    print("KERNEL_OK")
</pallas_src>

<mosaic_0001>
module attributes {stable_mosaic.version = 11 : i64} {
  func.func @_gaussian_policy_kernel(%arg0: i32, %arg1: memref<16x100xf32, #tpu.memory_space<vmem>>, %arg2: memref<100x256xbf16, #tpu.memory_space<vmem>>, %arg3: memref<1x256xf32, #tpu.memory_space<vmem>>, %arg4: memref<256x256xbf16, #tpu.memory_space<vmem>>, %arg5: memref<1x256xf32, #tpu.memory_space<vmem>>, %arg6: memref<256x128xbf16, #tpu.memory_space<vmem>>, %arg7: memref<1x128xf32, #tpu.memory_space<vmem>>, %arg8: memref<16x128xf32, #tpu.memory_space<vmem>>) attributes {dimension_semantics = [#tpu.dimension_semantics<parallel>], iteration_bounds = array<i64: 1>, scalar_prefetch = 0 : i64, scratch_operands = 0 : i64, tpu.core_type = #tpu.core_type<tc>, window_params = [{transform_indices = @transform_0, window_bounds = array<i64: 16, 100>}, {pipeline_mode = #tpu.pipeline_mode<synchronous>, transform_indices = @transform_1, window_bounds = array<i64: 100, 256>}, {pipeline_mode = #tpu.pipeline_mode<synchronous>, transform_indices = @transform_2, window_bounds = array<i64: 1, 256>}, {pipeline_mode = #tpu.pipeline_mode<synchronous>, transform_indices = @transform_3, window_bounds = array<i64: 256, 256>}, {pipeline_mode = #tpu.pipeline_mode<synchronous>, transform_indices = @transform_4, window_bounds = array<i64: 1, 256>}, {pipeline_mode = #tpu.pipeline_mode<synchronous>, transform_indices = @transform_5, window_bounds = array<i64: 256, 128>}, {pipeline_mode = #tpu.pipeline_mode<synchronous>, transform_indices = @transform_6, window_bounds = array<i64: 1, 128>}, {transform_indices = @transform_7, window_bounds = array<i64: 16, 128>}]} {
    %c0 = arith.constant 0 : index
    %c0_0 = arith.constant 0 : index
    %0 = vector.load %arg1[%c0, %c0_0] : memref<16x100xf32, #tpu.memory_space<vmem>>, vector<16x100xf32>
    %1 = arith.truncf %0 : vector<16x100xf32> to vector<16x100xbf16>
    %c0_1 = arith.constant 0 : index
    %c0_2 = arith.constant 0 : index
    %2 = vector.load %arg2[%c0_1, %c0_2] : memref<100x256xbf16, #tpu.memory_space<vmem>>, vector<100x256xbf16>
    %cst = arith.constant dense<0.000000e+00> : vector<16x256xf32>
    %3 = tpu.matmul %1, %2, %cst {dimension_numbers = #tpu.dot_dimension_numbers<[1], [0], [0], [1], [0, 0, 1, 1], [], []>} : vector<16x100xbf16>, vector<100x256xbf16>, vector<16x256xf32> -> vector<16x256xf32>
    %c0_3 = arith.constant 0 : index
    %c0_4 = arith.constant 0 : index
    %4 = vector.load %arg3[%c0_3, %c0_4] : memref<1x256xf32, #tpu.memory_space<vmem>>, vector<1x256xf32>
    %5 = vector.broadcast %4 : vector<1x256xf32> to vector<16x256xf32>
    %6 = arith.addf %3, %5 : vector<16x256xf32>
    %cst_5 = arith.constant 0.000000e+00 : f32
    %7 = vector.broadcast %cst_5 : f32 to vector<16x256xf32>
    %8 = arith.maximumf %6, %7 : vector<16x256xf32>
    %9 = arith.truncf %8 : vector<16x256xf32> to vector<16x256xbf16>
    %c0_6 = arith.constant 0 : index
    %c0_7 = arith.constant 0 : index
    %10 = vector.load %arg4[%c0_6, %c0_7] : memref<256x256xbf16, #tpu.memory_space<vmem>>, vector<256x256xbf16>
    %cst_8 = arith.constant dense<0.000000e+00> : vector<16x256xf32>
    %11 = tpu.matmul %9, %10, %cst_8 {dimension_numbers = #tpu.dot_dimension_numbers<[1], [0], [0], [1], [0, 0, 1, 1], [], []>} : vector<16x256xbf16>, vector<256x256xbf16>, vector<16x256xf32> -> vector<16x256xf32>
    %c0_9 = arith.constant 0 : index
    %c0_10 = arith.constant 0 : index
    %12 = vector.load %arg5[%c0_9, %c0_10] : memref<1x256xf32, #tpu.memory_space<vmem>>, vector<1x256xf32>
    %13 = vector.broadcast %12 : vector<1x256xf32> to vector<16x256xf32>
    %14 = arith.addf %11, %13 : vector<16x256xf32>
    %cst_11 = arith.constant 0.000000e+00 : f32
    %15 = vector.broadcast %cst_11 : f32 to vector<16x256xf32>
    %16 = arith.maximumf %14, %15 : vector<16x256xf32>
    %17 = arith.truncf %16 : vector<16x256xf32> to vector<16x256xbf16>
    %c0_12 = arith.constant 0 : index
    %c0_13 = arith.constant 0 : index
    %18 = vector.load %arg6[%c0_12, %c0_13] : memref<256x128xbf16, #tpu.memory_space<vmem>>, vector<256x128xbf16>
    %cst_14 = arith.constant dense<0.000000e+00> : vector<16x128xf32>
    %19 = tpu.matmul %17, %18, %cst_14 {dimension_numbers = #tpu.dot_dimension_numbers<[1], [0], [0], [1], [0, 0, 1, 1], [], []>} : vector<16x256xbf16>, vector<256x128xbf16>, vector<16x128xf32> -> vector<16x128xf32>
    %c0_15 = arith.constant 0 : index
    %c0_16 = arith.constant 0 : index
    %20 = vector.load %arg7[%c0_15, %c0_16] : memref<1x128xf32, #tpu.memory_space<vmem>>, vector<1x128xf32>
    %21 = vector.broadcast %20 : vector<1x128xf32> to vector<16x128xf32>
    %22 = arith.addf %19, %21 : vector<16x128xf32>
    %23 = tpu.iota {dimensions = array<i32: 1>} : vector<16x128xi32>
    %cst_17 = arith.constant -2.000000e+01 : f32
    %cst_18 = arith.constant 2.000000e+00 : f32
    %24 = vector.broadcast %cst_17 : f32 to vector<16x128xf32>
    %25 = arith.maximumf %24, %22 : vector<16x128xf32>
    %26 = vector.broadcast %cst_18 : f32 to vector<16x128xf32>
    %27 = arith.minimumf %26, %25 : vector<16x128xf32>
    %c1_i32 = arith.constant 1 : i32
    %28 = vector.broadcast %c1_i32 : i32 to vector<16x128xi32>
    %29 = arith.cmpi slt, %23, %28 : vector<16x128xi32>
    %30 = arith.select %29, %22, %27 : vector<16x128xi1>, vector<16x128xf32>
    %c0_19 = arith.constant 0 : index
    %c0_20 = arith.constant 0 : index
    %31 = vector.load %arg8[%c0_19, %c0_20] : memref<16x128xf32, #tpu.memory_space<vmem>>, vector<16x128xf32>
    tpu.vector_store %arg8[%c0_19, %c0_20], %30 {strides = array<i32>} : memref<16x128xf32, #tpu.memory_space<vmem>>, vector<16x128xf32>,
    return
  }
  func.func @transform_0(%arg0: i32) -> (i32, i32) {
    %c0_i32 = arith.constant 0 : i32
    %c0_i32_0 = arith.constant 0 : i32
    return %arg0, %c0_i32 : i32, i32
  }
  func.func @transform_1(%arg0: i32) -> (i32, i32) {
    %c0_i32 = arith.constant 0 : i32
    %c0_i32_0 = arith.constant 0 : i32
    %c0_i32_1 = arith.constant 0 : i32
    return %c0_i32, %c0_i32_0 : i32, i32
  }
  func.func @transform_2(%arg0: i32) -> (i32, i32) {
    %c0_i32 = arith.constant 0 : i32
    %c0_i32_0 = arith.constant 0 : i32
    %c0_i32_1 = arith.constant 0 : i32
    return %c0_i32, %c0_i32_0 : i32, i32
  }
  func.func @transform_3(%arg0: i32) -> (i32, i32) {
    %c0_i32 = arith.constant 0 : i32
    %c0_i32_0 = arith.constant 0 : i32
    %c0_i32_1 = arith.constant 0 : i32
    return %c0_i32, %c0_i32_0 : i32, i32
  }
  func.func @transform_4(%arg0: i32) -> (i32, i32) {
    %c0_i32 = arith.constant 0 : i32
    %c0_i32_0 = arith.constant 0 : i32
    %c0_i32_1 = arith.constant 0 : i32
    return %c0_i32, %c0_i32_0 : i32, i32
  }
  func.func @transform_5(%arg0: i32) -> (i32, i32) {
    %c0_i32 = arith.constant 0 : i32
    %c0_i32_0 = arith.constant 0 : i32
    %c0_i32_1 = arith.constant 0 : i32
    return %c0_i32, %c0_i32_0 : i32, i32
  }
  func.func @transform_6(%arg0: i32) -> (i32, i32) {
    %c0_i32 = arith.constant 0 : i32
    %c0_i32_0 = arith.constant 0 : i32
    %c0_i32_1 = arith.constant 0 : i32
    return %c0_i32, %c0_i32_0 : i32, i32
  }
  func.func @transform_7(%arg0: i32) -> (i32, i32) {
    %c0_i32 = arith.constant 0 : i32
    %c0_i32_0 = arith.constant 0 : i32
    return %arg0, %c0_i32 : i32, i32
  }
}

</mosaic_0001>

<llo_original>
// kernel: gaussian_policy_forward.1
$region0: #{gaussian_policy_forward.1}
  #allocation0 [shape = 'u32[]', space=smem, size = 0x4, offset = 0x4, fixed_abs, tag = 'smem constant byte address 0x4 - core index']
  #allocation1 [shape = 'u32[144,128]{1,0:T(1,128)}', space=vmem, size = 0x12000, scoped, tag = 'internal scratch']
  %s0 = inlined_call_operand.vmem [shape: f32[16,100], index: 0, kind: input, shape index: {}]
  %s1 = inlined_call_operand.hbm [shape: bf16[100,256], index: 1, kind: input, shape index: {}]
  %s2 = inlined_call_operand.vmem [shape: f32[1,256], index: 2, kind: input, shape index: {}]
  %s3 = inlined_call_operand.hbm [shape: bf16[256,256], index: 3, kind: input, shape index: {}]
  %s4 = inlined_call_operand.vmem [shape: f32[1,256], index: 4, kind: input, shape index: {}]
  %s5 = inlined_call_operand.hbm [shape: bf16[256,128], index: 5, kind: input, shape index: {}]
  %s6 = inlined_call_operand.vmem [shape: f32[1,128], index: 6, kind: input, shape index: {}]
  %s7 = inlined_call_operand.vmem [shape: f32[16,128], index: 7, kind: output, shape index: {}]
  %s8 = sld [smem:[#allocation0]]
  $region50: #{gaussian_policy_forward.1} parent=0
    _
  %s10 = ssub.s32 1, %s8
  %s11 = scalar_select 0, %s10, %s8
  $region1: #{gaussian_policy_forward.1} parent=0
    #allocation2 [shape = 'u8[53248]{0}', space=vmem, size = 0xd000, scoped, tag = 'input window, operand 1, single buffered']
    #allocation3 [shape = 's32[1]{0}', space=sflag, size = 0x4, scoped, tag = 'scoped memory for gaussian_policy_forward.1']
    #allocation4 [shape = 'u8[131072]{0}', space=vmem, size = 0x20000, scoped, tag = 'input window, operand 3, single buffered']
    #allocation5 [shape = 's32[1]{0}', space=sflag, size = 0x4, scoped, tag = 'scoped memory for gaussian_policy_forward.1']
    #allocation6 [shape = 'u8[65536]{0}', space=vmem, size = 0x10000, scoped, tag = 'input window, operand 5, single buffered']
    %12 = vsyncpa [#allocation3], 0
    %13 = vsyncpa [#allocation5], 0
    // Predicated region
    $region2: #{gaussian_policy_forward.1} parent=1 // pred_check
      _
    $region3: #{gaussian_policy_forward.1} parent=1 // pred_check_branch
      %15 = sbr.rel (0) target = $region5
    $region4: #{gaussian_policy_forward.1} parent=1 // pred_region
      _
    $region5: #{gaussian_policy_forward.1} parent=1 // pred_fallthru
      _
    // Predicated region
    $region6: #{gaussian_policy_forward.1} parent=1 // pred_check
      _
    $region7: #{gaussian_policy_forward.1} parent=1 // pred_check_branch
      %17 = sbr.rel (0) target = $region9
    $region8: #{gaussian_policy_forward.1} parent=1 // pred_region
      %s19 = ssub.s32 1664, 1664
      %20 = vsyncadd [#allocation3], %s19
      %s21 = sshll.u32 [#allocation2], 4
      %s22 = int_to_ptr.vmem [resolvable:$true] %s21
      %27 = dma.hbm_to_vmem [thread:$0]  %s1, 1664, %s22, [#allocation3], 128, 128, 8
    $region9: #{gaussian_policy_forward.1} parent=1 // pred_fallthru
      _
    // Predicated region
    $region10: #{gaussian_policy_forward.1} parent=1 // pred_check
      _
    $region11: #{gaussian_policy_forward.1} parent=1 // pred_check_branch
      %29 = sbr.rel (0) target = $region13
    $region12: #{gaussian_policy_forward.1} parent=1 // pred_region
      _
    $region13: #{gaussian_policy_forward.1} parent=1 // pred_fallthru
      _
    // Predicated region
    $region14: #{gaussian_policy_forward.1} parent=1 // pred_check
      _
    $region15: #{gaussian_policy_forward.1} parent=1 // pred_check_branch
      %31 = sbr.rel (0) target = $region17
    $region16: #{gaussian_policy_forward.1} parent=1 // pred_region
      %s33 = ssub.s32 4096, 4096
      %34 = vsyncadd [#allocation5], %s33
      %s35 = sshll.u32 [#allocation4], 4
      %s36 = int_to_ptr.vmem [resolvable:$true] %s35
      %41 = dma.hbm_to_vmem [thread:$0]  %s3, 4096, %s36, [#allocation5], 128, 128, 8
    $region17: #{gaussian_policy_forward.1} parent=1 // pred_fallthru
      _
    // Predicated region
    $region18: #{gaussian_policy_forward.1} parent=1 // pred_check
      _
    $region19: #{gaussian_policy_forward.1} parent=1 // pred_check_branch
      %43 = sbr.rel (0) target = $region21
    $region20: #{gaussian_policy_forward.1} parent=1 // pred_region
      _
    $region21: #{gaussian_policy_forward.1} parent=1 // pred_fallthru
      _
    // Predicated region
    $region22: #{gaussian_policy_forward.1} parent=1 // pred_check
      _
    $region23: #{gaussian_policy_forward.1} parent=1 // pred_check_branch
      %45 = sbr.rel (0) target = $region25
    $region24: #{gaussian_policy_forward.1} parent=1 // pred_region
      %s47 = ssub.s32 2048, 2048
      %48 = vsyncadd [#allocation5], %s47
      %s49 = sshll.u32 [#allocation6], 4
      %s50 = int_to_ptr.vmem [resolvable:$true] %s49
      %55 = dma.hbm_to_vmem [thread:$0]  %s5, 2048, %s50, [#allocation5], 64, 64, 4
    $region25: #{gaussian_policy_forward.1} parent=1 // pred_fallthru
      _
    // Predicated region
    $region26: #{gaussian_policy_forward.1} parent=1 // pred_check
      _
    $region27: #{gaussian_policy_forward.1} parent=1 // pred_check_branch
      %57 = sbr.rel (0) target = $region29
    $region28: #{gaussian_policy_forward.1} parent=1 // pred_region
      _
    $region29: #{gaussian_policy_forward.1} parent=1 // pred_fallthru
      _
    // Predicated region
    $region30: #{gaussian_policy_forward.1} parent=1 // pred_check
      _
    $region31: #{gaussian_policy_forward.1} parent=1 // pred_check_branch
      %59 = sbr.rel (0) target = $region33
    $region32: #{gaussian_policy_forward.1} parent=1 // pred_region
      %60 = dma.done [#allocation3], 1664
    $region33: #{gaussian_policy_forward.1} parent=1 // pred_fallthru
      _
    // Predicated region
    $region34: #{gaussian_policy_forward.1} parent=1 // pred_check
      _
    $region35: #{gaussian_policy_forward.1} parent=1 // pred_check_branch
      %62 = sbr.rel (0) target = $region37
    $region36: #{gaussian_policy_forward.1} parent=1 // pred_region
      %63 = dma.done [#allocation5], 4096
    $region37: #{gaussian_policy_forward.1} parent=1 // pred_fallthru
      _
    // Predicated region
    $region38: #{gaussian_policy_forward.1} parent=1 // pred_check
      _
    $region39: #{gaussian_policy_forward.1} parent=1 // pred_check_branch
      %65 = sbr.rel (0) target = $region41
    $region40: #{gaussian_policy_forward.1} parent=1 // pred_region
      %66 = dma.done [#allocation5], 2048
    $region41: #{gaussian_policy_forward.1} parent=1 // pred_fallthru
      _
    %v68 = vld [vmem:[%s0] sm:$0xff]
    %v69 = vld [vmem:[%s0 + $0x8] sm:$0xff]
    %v70 = vpack.c.bf16 %v69, %v68
    %v71 = vld [vmem:[#allocation2] sm:$0xff]
    %v72 = vld [vmem:[#allocation2 + $0x8] sm:$0xff]
    %v73 = vld [vmem:[#allocation2 + $0x10] sm:$0xff]
    %v74 = vld [vmem:[#allocation2 + $0x18] sm:$0xff]
    %v75 = vld [vmem:[#allocation2 + $0x20] sm:$0xff]
    %v76 = vld [vmem:[#allocation2 + $0x28] sm:$0xff]
    %v77 = vld [vmem:[#allocation2 + $0x30] sm:$0xff]
    %v78 = vld [vmem:[#allocation2 + $0x38] sm:$0xff]
    %v79 = vld [vmem:[#allocation2 + $0x40] sm:$0xff]
    %v80 = vld [vmem:[#allocation2 + $0x48] sm:$0xff]
    %v81 = vld [vmem:[#allocation2 + $0x50] sm:$0xff]
    %v82 = vld [vmem:[#allocation2 + $0x58] sm:$0xff]
    %v83 = vld [vmem:[#allocation2 + $0x60] sm:$0x33]
    %v84 = vld [vmem:[%s2] sm:$0x3]
    %v86 = vlaneseq
    %v87 = vshrl.u32 %v86, 7
    %v88 = vsub.s32 0, %v87
    %v89 = vrot.slane %v84, %v88
    %v90 = vlaneseq
    %v91 = vshrl.u32 %v90, 7
    %v92 = vsub.s32 1, %v91
    %v93 = vrot.slane %v84, %v92
    %v109 = vunpack.c.l.b16 %v71
    %v110 = vunpack.c.h.b16 %v71
    %v111 = vunpack.c.l.b16 %v72
    %v112 = vunpack.c.h.b16 %v72
    %v113 = vunpack.c.l.b16 %v73
    %v114 = vunpack.c.h.b16 %v73
    %v115 = vunpack.c.l.b16 %v74
    %v116 = vunpack.c.h.b16 %v74
    %v117 = vunpack.c.l.b16 %v75
    %v118 = vunpack.c.h.b16 %v75
    %v119 = vunpack.c.l.b16 %v76
    %v120 = vunpack.c.h.b16 %v76
    %v121 = vunpack.c.l.b16 %v77
    %v122 = vunpack.c.h.b16 %v77
    %v123 = vunpack.c.l.b16 %v78
    %v124 = vunpack.c.h.b16 %v78
    %v125 = vunpack.c.l.b16 %v79
    %v126 = vunpack.c.h.b16 %v79
    %v127 = vunpack.c.l.b16 %v80
    %v128 = vunpack.c.h.b16 %v80
    %v129 = vunpack.c.l.b16 %v81
    %v130 = vunpack.c.h.b16 %v81
    %v131 = vunpack.c.l.b16 %v82
    %v132 = vunpack.c.h.b16 %v82
    %v133 = vunpack.c.l.b16 %v83
    %v134 = vunpack.c.h.b16 %v83
    %v135 = vpack.c.b16 %v111, %v109
    %v136 = vpack.c.b16 %v112, %v110
    %v137 = vpack.c.b16 %v115, %v113
    %v138 = vpack.c.b16 %v116, %v114
    %v139 = vpack.c.b16 %v119, %v117
    %v140 = vpack.c.b16 %v120, %v118
    %v141 = vpack.c.b16 %v123, %v121
    %v142 = vpack.c.b16 %v124, %v122
    %v143 = vpack.c.b16 %v127, %v125
    %v144 = vpack.c.b16 %v128, %v126
    %v145 = vpack.c.b16 %v131, %v129
    %v146 = vpack.c.b16 %v132, %v130
    %v147 = vpack.c.b16 %v133, %v133
    %v148 = vpack.c.b16 %v134, %v134
    %vm161 = vcmask 818176
    %v163 = vsel %vm161, %v70, 0
    %vm165 = vcmask 1041408
    %v167 = vsel %vm165, %v147, 0
    %v170 = vsel %vm165, %v148, 0
    %172 = vmatprep.subr.bf16.mxu0 %v136
    %173 = vmatpush1.bf16.msra.mxu0 %v135
    %174 = vmatprep.subr.bf16.mxu0 %v138
    %175 = vmatpush1.bf16.msra.mxu0 %v137
    %176 = vmatprep.subr.bf16.mxu0 %v140
    %177 = vmatpush1.bf16.msra.mxu0 %v139
    %178 = vmatprep.subr.bf16.mxu0 %v142
    %179 = vmatpush1.bf16.msra.mxu0 %v141
    %180 = vmatprep.subr.bf16.mxu0 %v144
    %181 = vmatpush1.bf16.msra.mxu0 %v143
    %182 = vmatprep.subr.bf16.mxu0 %v146
    %183 = vmatpush1.bf16.msra.mxu0 %v145
    %184 = vmatprep.subr.bf16.mxu0 %v170
    %185 = vmatpush1.bf16.msra.mxu0 %v167
    %186 = vmatprep.subr.bf16.mxu0 0
    %187 = vmatpush1.bf16.msra.mxu0 0
    %188 = vmatprep.subr.bf16.mxu0 0
    %189 = vmatpush1.bf16.msra.mxu0 0
    %190 = vmatprep.subr.bf16.mxu0 0
    %191 = vmatpush1.bf16.msra.mxu0 0
    %192 = vmatprep.subr.bf16.mxu0 0
    %193 = vmatpush1.bf16.msra.mxu0 0
    %194 = vmatprep.subr.bf16.mxu0 0
    %195 = vmatpush1.bf16.msra.mxu0 0
    %196 = vmatprep.subr.bf16.mxu0 0
    %197 = vmatpush1.bf16.msra.mxu0 0
    %198 = vmatprep.subr.bf16.mxu0 0
    %199 = vmatpush1.bf16.msra.mxu0 0
    %200 = vmatprep.subr.bf16.mxu0 0
    %201 = vmatpush1.bf16.msra.mxu0 0
    %202 = vmatprep.subr.bf16.mxu0 0
    %203 = vmatpush1.bf16.msra.mxu0 0
    %204 = vmatprep.mubr.bf16.mxu0 0
    %205 = vmatmul.mubr.bf16.gmra.mrb[0].mxu0 %v163
    %v206 = vpop.f32.mrb[0].mxu0
    %v207 = vadd.f32 %v89, %v206
    %v208 = vpop.f32.mrb[0].mxu0
    %v209 = vadd.f32 %v93, %v208
    %v210 = vpop.f32.mrb[0].mxu0
    %v211 = vadd.f32 %v89, %v210
    %v212 = vpop.f32.mrb[0].mxu0
    %v213 = vadd.f32 %v93, %v212
    %214 = vdwg.mxu0
    %v215 = vmax.f32 %v207, 0.0
    %v216 = vmax.f32 %v209, 0.0
    %v217 = vmax.f32 %v211, 0.0
    %v218 = vmax.f32 %v213, 0.0
    %v219 = vpack.c.bf16 %v217, %v215
    %v220 = vpack.c.bf16 %v218, %v216
    %v221 = vld [vmem:[#allocation4] sm:$0xff]
    %v222 = vld [vmem:[#allocation4 + $0x8] sm:$0xff]
    %v223 = vld [vmem:[#allocation4 + $0x10] sm:$0xff]
    %v224 = vld [vmem:[#allocation4 + $0x18] sm:$0xff]
    %v225 = vld [vmem:[#allocation4 + $0x20] sm:$0xff]
    %v226 = vld [vmem:[#allocation4 + $0x28] sm:$0xff]
    %v227 = vld [vmem:[#allocation4 + $0x30] sm:$0xff]
    %v228 = vld [vmem:[#allocation4 + $0x38] sm:$0xff]
    %v229 = vld [vmem:[#allocation4 + $0x40] sm:$0xff]
    %v230 = vld [vmem:[#allocation4 + $0x48] sm:$0xff]
    %v231 = vld [vmem:[#allocation4 + $0x50] sm:$0xff]
    %v232 = vld [vmem:[#allocation4 + $0x58] sm:$0xff]
    %v233 = vld [vmem:[#allocation4 + $0x60] sm:$0xff]
    %v234 = vld [vmem:[#allocation4 + $0x68] sm:$0xff]
    %v235 = vld [vmem:[#allocation4 + $0x70] sm:$0xff]
    %v236 = vld [vmem:[#allocation4 + $0x78] sm:$0xff]
    %v237 = vld [vmem:[#allocation4 + $0x80] sm:$0xff]
    %v238 = vld [vmem:[#allocation4 + $0x88] sm:$0xff]
    %v239 = vld [vmem:[#allocation4 + $0x90] sm:$0xff]
    %v240 = vld [vmem:[#allocation4 + $0x98] sm:$0xff]
    %v241 = vld [vmem:[#allocation4 + $0xa0] sm:$0xff]
    %v242 = vld [vmem:[#allocation4 + $0xa8] sm:$0xff]
    %v243 = vld [vmem:[#allocation4 + $0xb0] sm:$0xff]
    %v244 = vld [vmem:[#allocation4 + $0xb8] sm:$0xff]
    %v245 = vld [vmem:[#allocation4 + $0xc0] sm:$0xff]
    %v246 = vld [vmem:[#allocation4 + $0xc8] sm:$0xff]
    %v247 = vld [vmem:[#allocation4 + $0xd0] sm:$0xff]
    %v248 = vld [vmem:[#allocation4 + $0xd8] sm:$0xff]
    %v249 = vld [vmem:[#allocation4 + $0xe0] sm:$0xff]
    %v250 = vld [vmem:[#allocation4 + $0xe8] sm:$0xff]
    %v251 = vld [vmem:[#allocation4 + $0xf0] sm:$0xff]
    %v252 = vld [vmem:[#allocation4 + $0xf8] sm:$0xff]
    %v253 = vld [vmem:[%s4] sm:$0x3]
    %v255 = vlaneseq
    %v256 = vshrl.u32 %v255, 7
    %v257 = vsub.s32 0, %v256
    %v258 = vrot.slane %v253, %v257
    %v259 = vlaneseq
    %v260 = vshrl.u32 %v259, 7
    %v261 = vsub.s32 1, %v260
    %v262 = vrot.slane %v253, %v261
    %v297 = vunpack.c.l.b16 %v221
    %v298 = vunpack.c.h.b16 %v221
    %v299 = vunpack.c.l.b16 %v222
    %v300 = vunpack.c.h.b16 %v222
    %v301 = vunpack.c.l.b16 %v223
    %v302 = vunpack.c.h.b16 %v223
    %v303 = vunpack.c.l.b16 %v224
    %v304 = vunpack.c.h.b16 %v224
    %v305 = vunpack.c.l.b16 %v225
    %v306 = vunpack.c.h.b16 %v225
    %v307 = vunpack.c.l.b16 %v226
    %v308 = vunpack.c.h.b16 %v226
    %v309 = vunpack.c.l.b16 %v227
    %v310 = vunpack.c.h.b16 %v227
    %v311 = vunpack.c.l.b16 %v228
    %v312 = vunpack.c.h.b16 %v228
    %v313 = vunpack.c.l.b16 %v229
    %v314 = vunpack.c.h.b16 %v229
    %v315 = vunpack.c.l.b16 %v230
    %v316 = vunpack.c.h.b16 %v230
    %v317 = vunpack.c.l.b16 %v231
    %v318 = vunpack.c.h.b16 %v231
    %v319 = vunpack.c.l.b16 %v232
    %v320 = vunpack.c.h.b16 %v232
    %v321 = vunpack.c.l.b16 %v233
    %v322 = vunpack.c.h.b16 %v233
    %v323 = vunpack.c.l.b16 %v234
    %v324 = vunpack.c.h.b16 %v234
    %v325 = vunpack.c.l.b16 %v235
    %v326 = vunpack.c.h.b16 %v235
    %v327 = vunpack.c.l.b16 %v236
    %v328 = vunpack.c.h.b16 %v236
    %v329 = vunpack.c.l.b16 %v237
    %v330 = vunpack.c.h.b16 %v237
    %v331 = vunpack.c.l.b16 %v238
    %v332 = vunpack.c.h.b16 %v238
    %v333 = vunpack.c.l.b16 %v239
    %v334 = vunpack.c.h.b16 %v239
    %v335 = vunpack.c.l.b16 %v240
    %v336 = vunpack.c.h.b16 %v240
    %v337 = vunpack.c.l.b16 %v241
    %v338 = vunpack.c.h.b16 %v241
    %v339 = vunpack.c.l.b16 %v242
    %v340 = vunpack.c.h.b16 %v242
    %v341 = vunpack.c.l.b16 %v243
    %v342 = vunpack.c.h.b16 %v243
    %v343 = vunpack.c.l.b16 %v244
    %v344 = vunpack.c.h.b16 %v244
    %v345 = vunpack.c.l.b16 %v245
    %v346 = vunpack.c.h.b16 %v245
    %v347 = vunpack.c.l.b16 %v246
    %v348 = vunpack.c.h.b16 %v246
    %v349 = vunpack.c.l.b16 %v247
    %v350 = vunpack.c.h.b16 %v247
    %v351 = vunpack.c.l.b16 %v248
    %v352 = vunpack.c.h.b16 %v248
    %v353 = vunpack.c.l.b16 %v249
    %v354 = vunpack.c.h.b16 %v249
    %v355 = vunpack.c.l.b16 %v250
    %v356 = vunpack.c.h.b16 %v250
    %v357 = vunpack.c.l.b16 %v251
    %v358 = vunpack.c.h.b16 %v251
    %v359 = vunpack.c.l.b16 %v252
    %v360 = vunpack.c.h.b16 %v252
    %v361 = vpack.c.b16 %v299, %v297
    %v362 = vpack.c.b16 %v300, %v298
    %v363 = vpack.c.b16 %v303, %v301
    %v364 = vpack.c.b16 %v304, %v302
    %v365 = vpack.c.b16 %v307, %v305
    %v366 = vpack.c.b16 %v308, %v306
    %v367 = vpack.c.b16 %v311, %v309
    %v368 = vpack.c.b16 %v312, %v310
    %v369 = vpack.c.b16 %v315, %v313
    %v370 = vpack.c.b16 %v316, %v314
    %v371 = vpack.c.b16 %v319, %v317
    %v372 = vpack.c.b16 %v320, %v318
    %v373 = vpack.c.b16 %v323, %v321
    %v374 = vpack.c.b16 %v324, %v322
    %v375 = vpack.c.b16 %v327, %v325
    %v376 = vpack.c.b16 %v328, %v326
    %v377 = vpack.c.b16 %v331, %v329
    %v378 = vpack.c.b16 %v332, %v330
    %v379 = vpack.c.b16 %v335, %v333
    %v380 = vpack.c.b16 %v336, %v334
    %v381 = vpack.c.b16 %v339, %v337
    %v382 = vpack.c.b16 %v340, %v338
    %v383 = vpack.c.b16 %v343, %v341
    %v384 = vpack.c.b16 %v344, %v342
    %v385 = vpack.c.b16 %v347, %v345
    %v386 = vpack.c.b16 %v348, %v346
    %v387 = vpack.c.b16 %v351, %v349
    %v388 = vpack.c.b16 %v352, %v350
    %v389 = vpack.c.b16 %v355, %v353
    %v390 = vpack.c.b16 %v356, %v354
    %v391 = vpack.c.b16 %v359, %v357
    %v392 = vpack.c.b16 %v360, %v358
    %425 = vmatprep.subr.bf16.mxu0 %v362
    %426 = vmatpush1.bf16.msra.mxu0 %v361
    %427 = vmatprep.subr.bf16.mxu0 %v364
    %428 = vmatpush1.bf16.msra.mxu0 %v363
    %429 = vmatprep.subr.bf16.mxu0 %v366
    %430 = vmatpush1.bf16.msra.mxu0 %v365
    %431 = vmatprep.subr.bf16.mxu0 %v368
    %432 = vmatpush1.bf16.msra.mxu0 %v367
    %433 = vmatprep.subr.bf16.mxu0 %v370
    %434 = vmatpush1.bf16.msra.mxu0 %v369
    %435 = vmatprep.subr.bf16.mxu0 %v372
    %436 = vmatpush1.bf16.msra.mxu0 %v371
    %437 = vmatprep.subr.bf16.mxu0 %v374
    %438 = vmatpush1.bf16.msra.mxu0 %v373
    %439 = vmatprep.subr.bf16.mxu0 %v376
    %440 = vmatpush1.bf16.msra.mxu0 %v375
    %441 = vmatprep.subr.bf16.mxu0 %v378
    %442 = vmatpush1.bf16.msra.mxu0 %v377
    %443 = vmatprep.subr.bf16.mxu0 %v380
    %444 = vmatpush1.bf16.msra.mxu0 %v379
    %445 = vmatprep.subr.bf16.mxu0 %v382
    %446 = vmatpush1.bf16.msra.mxu0 %v381
    %447 = vmatprep.subr.bf16.mxu0 %v384
    %448 = vmatpush1.bf16.msra.mxu0 %v383
    %449 = vmatprep.subr.bf16.mxu0 %v386
    %450 = vmatpush1.bf16.msra.mxu0 %v385
    %451 = vmatprep.subr.bf16.mxu0 %v388
    %452 = vmatpush1.bf16.msra.mxu0 %v387
    %453 = vmatprep.subr.bf16.mxu0 %v390
    %454 = vmatpush1.bf16.msra.mxu0 %v389
    %455 = vmatprep.subr.bf16.mxu0 %v392
    %456 = vmatpush1.bf16.msra.mxu0 %v391
    %457 = vmatprep.mubr.bf16.mxu0 %v220
    %458 = vmatmul.mubr.bf16.gmra.mrb[0].mxu0 %v219
    %v459 = vpop.f32.mrb[0].mxu0
    %v460 = vadd.f32 %v258, %v459
    %v461 = vpop.f32.mrb[0].mxu0
    %v462 = vadd.f32 %v262, %v461
    %v463 = vpop.f32.mrb[0].mxu0
    %v464 = vadd.f32 %v258, %v463
    %v465 = vpop.f32.mrb[0].mxu0
    %v466 = vadd.f32 %v262, %v465
    %467 = vdwg.mxu0
    %v468 = vmax.f32 %v460, 0.0
    %v469 = vmax.f32 %v462, 0.0
    %v470 = vmax.f32 %v464, 0.0
    %v471 = vmax.f32 %v466, 0.0
    %v472 = vpack.c.bf16 %v470, %v468
    %v473 = vpack.c.bf16 %v471, %v469
    %v474 = vld [vmem:[#allocation6] sm:$0xf]
    %v475 = vld [vmem:[#allocation6 + $0x4] sm:$0xf]
    %v476 = vld [vmem:[#allocation6 + $0x8] sm:$0xf]
    %v477 = vld [vmem:[#allocation6 + $0xc] sm:$0xf]
    %v478 = vld [vmem:[#allocation6 + $0x10] sm:$0xf]
    %v479 = vld [vmem:[#allocation6 + $0x14] sm:$0xf]
    %v480 = vld [vmem:[#allocation6 + $0x18] sm:$0xf]
    %v481 = vld [vmem:[#allocation6 + $0x1c] sm:$0xf]
    %v482 = vld [vmem:[#allocation6 + $0x20] sm:$0xf]
    %v483 = vld [vmem:[#allocation6 + $0x24] sm:$0xf]
    %v484 = vld [vmem:[#allocation6 + $0x28] sm:$0xf]
    %v485 = vld [vmem:[#allocation6 + $0x2c] sm:$0xf]
    %v486 = vld [vmem:[#allocation6 + $0x30] sm:$0xf]
    %v487 = vld [vmem:[#allocation6 + $0x34] sm:$0xf]
    %v488 = vld [vmem:[#allocation6 + $0x38] sm:$0xf]
    %v489 = vld [vmem:[#allocation6 + $0x3c] sm:$0xf]
    %v490 = vld [vmem:[#allocation6 + $0x40] sm:$0xf]
    %v491 = vld [vmem:[#allocation6 + $0x44] sm:$0xf]
    %v492 = vld [vmem:[#allocation6 + $0x48] sm:$0xf]
    %v493 = vld [vmem:[#allocation6 + $0x4c] sm:$0xf]
    %v494 = vld [vmem:[#allocation6 + $0x50] sm:$0xf]
    %v495 = vld [vmem:[#allocation6 + $0x54] sm:$0xf]
    %v496 = vld [vmem:[#allocation6 + $0x58] sm:$0xf]
    %v497 = vld [vmem:[#allocation6 + $0x5c] sm:$0xf]
    %v498 = vld [vmem:[#allocation6 + $0x60] sm:$0xf]
    %v499 = vld [vmem:[#allocation6 + $0x64] sm:$0xf]
    %v500 = vld [vmem:[#allocation6 + $0x68] sm:$0xf]
    %v501 = vld [vmem:[#allocation6 + $0x6c] sm:$0xf]
    %v502 = vld [vmem:[#allocation6 + $0x70] sm:$0xf]
    %v503 = vld [vmem:[#allocation6 + $0x74] sm:$0xf]
    %v504 = vld [vmem:[#allocation6 + $0x78] sm:$0xf]
    %v505 = vld [vmem:[#allocation6 + $0x7c] sm:$0xf]
    %v506 = vld [vmem:[%s6] sm:$0x1]
    %v508 = vlaneseq
    %v509 = vshrl.u32 %v508, 7
    %v510 = vsub.s32 0, %v509
    %v511 = vrot.slane %v506, %v510
    %v545 = vunpack.c.l.b16 %v474
    %v546 = vunpack.c.l.b16 %v475
    %v547 = vunpack.c.l.b16 %v476
    %v548 = vunpack.c.l.b16 %v477
    %v549 = vunpack.c.l.b16 %v478
    %v550 = vunpack.c.l.b16 %v479
    %v551 = vunpack.c.l.b16 %v480
    %v552 = vunpack.c.l.b16 %v481
    %v553 = vunpack.c.l.b16 %v482
    %v554 = vunpack.c.l.b16 %v483
    %v555 = vunpack.c.l.b16 %v484
    %v556 = vunpack.c.l.b16 %v485
    %v557 = vunpack.c.l.b16 %v486
    %v558 = vunpack.c.l.b16 %v487
    %v559 = vunpack.c.l.b16 %v488
    %v560 = vunpack.c.l.b16 %v489
    %v561 = vunpack.c.l.b16 %v490
    %v562 = vunpack.c.l.b16 %v491
    %v563 = vunpack.c.l.b16 %v492
    %v564 = vunpack.c.l.b16 %v493
    %v565 = vunpack.c.l.b16 %v494
    %v566 = vunpack.c.l.b16 %v495
    %v567 = vunpack.c.l.b16 %v496
    %v568 = vunpack.c.l.b16 %v497
    %v569 = vunpack.c.l.b16 %v498
    %v570 = vunpack.c.l.b16 %v499
    %v571 = vunpack.c.l.b16 %v500
    %v572 = vunpack.c.l.b16 %v501
    %v573 = vunpack.c.l.b16 %v502
    %v574 = vunpack.c.l.b16 %v503
    %v575 = vunpack.c.l.b16 %v504
    %v576 = vunpack.c.l.b16 %v505
    %v577 = vpack.c.b16 %v546, %v545
    %v578 = vpack.c.b16 %v548, %v547
    %v579 = vpack.c.b16 %v550, %v549
    %v580 = vpack.c.b16 %v552, %v551
    %v581 = vpack.c.b16 %v554, %v553
    %v582 = vpack.c.b16 %v556, %v555
    %v583 = vpack.c.b16 %v558, %v557
    %v584 = vpack.c.b16 %v560, %v559
    %v585 = vpack.c.b16 %v562, %v561
    %v586 = vpack.c.b16 %v564, %v563
    %v587 = vpack.c.b16 %v566, %v565
    %v588 = vpack.c.b16 %v568, %v567
    %v589 = vpack.c.b16 %v570, %v569
    %v590 = vpack.c.b16 %v572, %v571
    %v591 = vpack.c.b16 %v574, %v573
    %v592 = vpack.c.b16 %v576, %v575
    %609 = vmatprep.subr.bf16.mxu0 0
    %610 = vmatpush1.bf16.msra.mxu0 %v577
    %611 = vmatprep.subr.bf16.mxu0 0
    %612 = vmatpush1.bf16.msra.mxu0 %v578
    %613 = vmatprep.subr.bf16.mxu0 0
    %614 = vmatpush1.bf16.msra.mxu0 %v579
    %615 = vmatprep.subr.bf16.mxu0 0
    %616 = vmatpush1.bf16.msra.mxu0 %v580
    %617 = vmatprep.subr.bf16.mxu0 0
    %618 = vmatpush1.bf16.msra.mxu0 %v581
    %619 = vmatprep.subr.bf16.mxu0 0
    %620 = vmatpush1.bf16.msra.mxu0 %v582
    %621 = vmatprep.subr.bf16.mxu0 0
    %622 = vmatpush1.bf16.msra.mxu0 %v583
    %623 = vmatprep.subr.bf16.mxu0 0
    %624 = vmatpush1.bf16.msra.mxu0 %v584
    %625 = vmatprep.subr.bf16.mxu0 0
    %626 = vmatpush1.bf16.msra.mxu0 %v585
    %627 = vmatprep.subr.bf16.mxu0 0
    %628 = vmatpush1.bf16.msra.mxu0 %v586
    %629 = vmatprep.subr.bf16.mxu0 0
    %630 = vmatpush1.bf16.msra.mxu0 %v587
    %631 = vmatprep.subr.bf16.mxu0 0
    %632 = vmatpush1.bf16.msra.mxu0 %v588
    %633 = vmatprep.subr.bf16.mxu0 0
    %634 = vmatpush1.bf16.msra.mxu0 %v589
    %635 = vmatprep.subr.bf16.mxu0 0
    %636 = vmatpush1.bf16.msra.mxu0 %v590
    %637 = vmatprep.subr.bf16.mxu0 0
    %638 = vmatpush1.bf16.msra.mxu0 %v591
    %639 = vmatprep.subr.bf16.mxu0 0
    %640 = vmatpush1.bf16.msra.mxu0 %v592
    %641 = vmatprep.mubr.bf16.mxu0 %v473
    %642 = vmatmul.mubr.bf16.gmra.mrb[0].mxu0 %v472
    %v643 = vpop.f32.mrb[0].mxu0
    %v644 = vadd.f32 %v511, %v643
    %v645 = vpop.f32.mrb[0].mxu0
    %v646 = vpop.f32.mrb[0].mxu0
    %v647 = vadd.f32 %v511, %v646
    %v648 = vpop.f32.mrb[0].mxu0
    %649 = vdwg.mxu0
    %v650 = vlaneseq
    %v651 = vand.u32 %v650, 127
    %v652 = vmax.f32 %v644, -20.0
    %v653 = vmax.f32 %v647, -20.0
    %v654 = vmin.f32 %v652, 2.0
    %v655 = vmin.f32 %v653, 2.0
    %vm656 = vcmp.lt.s32.totalorder %v651, 1
    %v657 = vsel %vm656, %v644, %v654
    %v658 = vsel %vm656, %v647, %v655
    %659 = vst [vmem:[%s7] sm:$0xff] %v657
    %660 = vst [vmem:[%s7 + $0x8] sm:$0xff] %v658
    // Predicated region
    $region42: #{gaussian_policy_forward.1} parent=1 // pred_check
      _
    $region43: #{gaussian_policy_forward.1} parent=1 // pred_check_branch
      %662 = sbr.rel (0) target = $region45
    $region44: #{gaussian_policy_forward.1} parent=1 // pred_region
      _
    $region45: #{gaussian_policy_forward.1} parent=1 // pred_fallthru
      _
    // Predicated region
    $region46: #{gaussian_policy_forward.1} parent=1 // pred_check
      _
    $region47: #{gaussian_policy_forward.1} parent=1 // pred_check_branch
      %664 = sbr.rel (0) target = $region49
    $region48: #{gaussian_policy_forward.1} parent=1 // pred_region
      _
    $region49: #{gaussian_policy_forward.1} parent=1 // pred_fallthru
      _
    %665 = vsyncpa [#allocation3], 1
    %666 = vsyncpa [#allocation5], 1

</llo_original>
